<compile_context>
chip_gen: v7x
topology: tpu7x:2x2x1
jax: 0.10.0
libtpu: 0.0.40
codegen_flags: <defaults>
</compile_context>

<pallas_src>
import numpy as np
import jax
import jax.numpy as jnp
from jax import lax
from jax.experimental import pallas as pl
from jax.experimental.pallas import tpu as pltpu


# ----------------------------- hardware queries ------------------------------

def _vmem_capacity_bytes():
    try:
        info = pltpu.get_tpu_info()
        cap = int(getattr(info, "vmem_capacity_bytes", 0) or 0)
        if cap > 0:
            return cap
    except Exception:
        pass
    return 64 << 20          # conservative fallback (v7x physical VMEM)


def _num_tensorcores():
    """Best-effort TensorCore-per-chip count; defaults to 1 if unknown."""
    try:
        info = pltpu.get_tpu_info()
    except Exception:
        info = None
    for name in ("tensorcore_count", "num_tensorcores", "num_cores", "core_count"):
        v = getattr(info, name, None) if info is not None else None
        if isinstance(v, int) and v in (1, 2):
            return v
    try:
        v = getattr(jax.devices()[0], "num_cores", None)
        if isinstance(v, int) and v in (1, 2):
            return v
    except Exception:
        pass
    return 1


def _compiler_params(semantics, working_bytes, cap):
    limit = int(working_bytes) + (8 << 20)
    limit = max(limit, 16 << 20)
    limit = min(limit, cap)
    return pltpu.CompilerParams(dimension_semantics=semantics,
                                vmem_limit_bytes=limit)


def _cdiv(a, b):
    return -(-a // b)


def _sublane_multiple(itemsize):
    return max(8, 32 // int(itemsize))


# --------------------------- in-kernel helpers --------------------------------

def _pool_chunking(C, HW, itemsize):
    """Chunk setup for the fused pooled sum.

    Returns (chunk, n_chunks, extra_temp_bytes).  Chunking (only used for
    sub-32-bit dtypes) avoids materializing a full-slab f32 temporary from the
    .astype(f32); when not possible the temp is accounted instead."""
    if itemsize >= 4:
        return HW, 1, 0
    chunk = None
    t = 128
    while t <= min(HW, 2048):
        if HW % t == 0:
            chunk = t
        t += 128
    if chunk is None or chunk == HW:
        return HW, 1, C * HW * 4            # direct sum; account the cast temp
    return chunk, HW // chunk, C * chunk * 4


def _pooled_sum_f32(x_ref, chunk, n_chunks):
    """Sum of an (1, Cb, HWb) ref over the lane axis, accumulated in f32."""
    if n_chunks <= 1:
        return jnp.sum(x_ref[...].astype(jnp.float32), axis=-1)
    cb = x_ref.shape[1]

    def body(i, acc):
        start = pl.multiple_of(i * chunk, 128)
        sl = x_ref[:, :, pl.ds(start, chunk)].astype(jnp.float32)
        return acc + jnp.sum(sl, axis=-1)

    return lax.fori_loop(0, n_chunks, body, jnp.zeros((1, cb), jnp.float32))


def _channel_conv_sigmoid(y, w_ref, C, k, pad):
    """Zero-padded k-tap 1-D conv over channels + sigmoid. y: (1, C) f32.

    Runs once per batch element; cost is negligible next to the HBM stream, so
    the simple concat+slice form is kept (taps are SMEM scalar reads)."""
    if pad > 0:
        z = jnp.zeros((1, pad), jnp.float32)
        yp = jnp.concatenate([z, y, z], axis=1)
    else:
        yp = y
    conv = jnp.zeros((1, C), jnp.float32)
    for j in range(k):                                  # k <= 9, static unroll
        conv = conv + w_ref[j] * yp[:, j:j + C]
    return jax.nn.sigmoid(conv)


# ----------------------------- fused single pass ------------------------------

def _eca_fused(x3, w1d, C, HW, k, pad, cap):
    B = x3.shape[0]
    inv_hw = 1.0 / float(HW)
    itemsize = jnp.dtype(x3.dtype).itemsize
    slab = C * HW * itemsize
    chunk, n_chunks, temp_bytes = _pool_chunking(C, HW, itemsize)
    work = 4 * slab + temp_bytes + (1 << 20)

    def kernel(x_ref, w_ref, o_ref):
        y = _pooled_sum_f32(x_ref, chunk, n_chunks) * inv_hw      # (1, C) f32
        s = _channel_conv_sigmoid(y, w_ref, C, k, pad)            # (1, C) f32
        gate = s.astype(o_ref.dtype)[:, :, None]                  # (1, C, 1)
        o_ref[...] = x_ref[...] * gate

    return pl.pallas_call(
        kernel,
        out_shape=jax.ShapeDtypeStruct((B, C, HW), x3.dtype),
        grid_spec=pltpu.PrefetchScalarGridSpec(
            num_scalar_prefetch=0,
            grid=(B,),
            in_specs=[
                pl.BlockSpec((1, C, HW), lambda b: (b, 0, 0)),
                pl.BlockSpec(memory_space=pltpu.MemorySpace.SMEM),
            ],
            out_specs=pl.BlockSpec((1, C, HW), lambda b: (b, 0, 0)),
        ),
        compiler_params=_compiler_params(("parallel",), work, cap),
        cost_estimate=pl.CostEstimate(
            flops=2 * B * C * HW + 2 * B * C * k,
            transcendentals=B * C,
            bytes_accessed=2 * B * C * HW * itemsize),
    )(x3, w1d)


# --------------------- channel-tiled two-pass (large slabs) -------------------

def _eca_two_pass(x3, w1d, C, HW, k, pad, cap, c_tile, hw_tile):
    B = x3.shape[0]
    dtype = x3.dtype
    itemsize = jnp.dtype(dtype).itemsize
    inv_hw = 1.0 / float(HW)
    n_c = _cdiv(C, c_tile)
    n_hw = _cdiv(HW, hw_tile)
    ragged_hw = (HW % hw_tile) != 0
    tile_bytes = c_tile * hw_tile * itemsize

    # ---------------- pass 1: pooled mean per channel ----------------
    def pool_kernel(x_ref, o_ref):
        h = pl.program_id(2)

        @pl.when(h == 0)
        def _():
            o_ref[...] = jnp.zeros(o_ref.shape, jnp.float32)

        xb = x_ref[...].astype(jnp.float32)                # (1, Ct, Thw)
        if ragged_hw:
            lane = lax.broadcasted_iota(jnp.int32, xb.shape, 2)
            xb = jnp.where(h * hw_tile + lane < HW, xb, 0.0)
        o_ref[...] += jnp.sum(xb, axis=-1, keepdims=True)

        @pl.when(h == pl.num_programs(2) - 1)
        def _():
            o_ref[...] *= inv_hw

    pool_work = 2 * tile_bytes + 2 * c_tile * hw_tile * 4 + (1 << 20)
    means = pl.pallas_call(
        pool_kernel,
        out_shape=jax.ShapeDtypeStruct((B, C, 1), jnp.float32),
        grid_spec=pltpu.PrefetchScalarGridSpec(
            num_scalar_prefetch=0,
            grid=(B, n_c, n_hw),
            in_specs=[pl.BlockSpec((1, c_tile, hw_tile),
                                   lambda b, c, h: (b, c, h))],
            out_specs=pl.BlockSpec((1, c_tile, 1), lambda b, c, h: (b, c, 0)),
        ),
        compiler_params=_compiler_params(
            ("parallel", "parallel", "arbitrary"), pool_work, cap),
        cost_estimate=pl.CostEstimate(
            flops=B * C * HW, transcendentals=0,
            bytes_accessed=B * C * HW * itemsize + B * C * 4),
    )(x3)

    # -------- tiny (B, C) conv + sigmoid in plain JAX between passes --------
    y = means[:, :, 0]                                      # (B, C) f32
    yp = jnp.pad(y, ((0, 0), (pad, pad))) if pad > 0 else y
    conv = jnp.zeros_like(y)
    for j in range(k):
        conv = conv + w1d[j] * yp[:, j:j + C]
    gate = jax.nn.sigmoid(conv)[:, :, None]                 # (B, C, 1) f32

    # ---------------- pass 2: broadcast gate multiply ----------------
    def gate_mul_kernel(x_ref, s_ref, o_ref):
        o_ref[...] = x_ref[...] * s_ref[...].astype(o_ref.dtype)

    mul_work = 4 * tile_bytes + (1 << 20)
    return pl.pallas_call(
        gate_mul_kernel,
        out_shape=jax.ShapeDtypeStruct((B, C, HW), dtype),
        grid_spec=pltpu.PrefetchScalarGridSpec(
            num_scalar_prefetch=0,
            grid=(B, n_c, n_hw),
            in_specs=[
                pl.BlockSpec((1, c_tile, hw_tile), lambda b, c, h: (b, c, h)),
                pl.BlockSpec((1, c_tile, 1), lambda b, c, h: (b, c, 0)),
            ],
            out_specs=pl.BlockSpec((1, c_tile, hw_tile),
                                   lambda b, c, h: (b, c, h)),
        ),
        compiler_params=_compiler_params(
            ("parallel", "parallel", "parallel"), mul_work, cap),
        cost_estimate=pl.CostEstimate(
            flops=B * C * HW, transcendentals=0,
            bytes_accessed=2 * B * C * HW * itemsize + B * C * 4),
    )(x3, gate)


# ------------------------------- tile chooser ---------------------------------

def _pick_c_hw_tiles(C, HW, itemsize, target):
    """Pick (c_tile, hw_tile) for the two-pass path.

    Prefer full-HW rows (contiguous DMA), shrinking channels first; only tile
    HW (multiples of 128, preferring exact divisors) when a minimum channel
    tile still exceeds the per-step target."""
    sub = _sublane_multiple(itemsize)
    row = HW * itemsize
    if sub * row <= target:
        ct = (target // row) // sub * sub
        ct = max(sub, int(ct))
        if ct >= C:
            ct = C
        return int(ct), HW
    ct = C if C < sub else sub
    budget_lanes = max(128, int(target // (ct * itemsize)))
    thw = 0
    t = 128
    while t <= min(HW, budget_lanes):
        if HW % t == 0:
            thw = t
        t += 128
    if thw == 0:
        thw = max(128, (budget_lanes // 128) * 128)
        thw = min(thw, HW)
    return int(ct), int(thw)


# --------------------------------- wrapper ------------------------------------

def eca_block(x, conv_w, *, force_two_pass=False, c_tile=None, hw_tile=None):
    """ECA forward. x: (B, C, H, W); conv_w: (1, 1, k) Conv1d weight (no bias)."""
    B, C, H, W = x.shape
    HW = H * W
    k = int(conv_w.shape[-1])
    pad = (k - 1) // 2
    w1d = conv_w.reshape(k).astype(jnp.float32)
    x3 = x.reshape(B, C, HW)                      # lane-dense: H*W on lanes
    itemsize = jnp.dtype(x.dtype).itemsize
    slab = C * HW * itemsize

    capacity = _vmem_capacity_bytes()
    cap = int(0.75 * capacity)                    # generation-aware vmem_limit cap
    sub = _sublane_multiple(itemsize)

    _, _, fused_temp = _pool_chunking(C, HW, itemsize)
    fused_work = 4 * slab + fused_temp + (1 << 20)
    fits_fused = fused_work + (8 << 20) <= cap

    # On multi-TensorCore chips (v7x), a fused grid=(B,) with B < cores pins
    # the whole op on one core; the all-parallel channel-tiled path wins then.
    n_tc = _num_tensorcores()
    prefer_split = (n_tc > 1 and B < n_tc and C >= 2 * sub
                    and B * slab >= (8 << 20))

    use_two_pass = force_two_pass or (not fits_fused) or prefer_split

    if use_two_pass:
        target = min(max(capacity // 16, 4 << 20), 8 << 20)
        auto_ct, auto_thw = _pick_c_hw_tiles(C, HW, itemsize, target)
        ct = int(c_tile) if c_tile is not None else auto_ct
        thw = int(hw_tile) if hw_tile is not None else auto_thw
        assert ct == C or ct % sub == 0, "c_tile must be a multiple of the sublane size or == C"
        assert thw == HW or thw % 128 == 0, "hw_tile must be a multiple of 128 or == H*W"
        out3 = _eca_two_pass(x3, w1d, C, HW, k, pad, cap, ct, thw)
    else:
        out3 = _eca_fused(x3, w1d, C, HW, k, pad, cap)
    return out3.reshape(B, C, H, W)


# -------------------------------- reference -----------------------------------

def eca_reference(x, conv_w):
    """Pure-JAX (f32) reference mirroring the PyTorch forward."""
    B, C, H, W = x.shape
    k = conv_w.shape[-1]
    pad = (k - 1) // 2
    xf = x.astype(jnp.float32)
    wf = conv_w.astype(jnp.float32)
    y = jnp.mean(xf, axis=(2, 3))                          # (B, C)
    yp = jnp.pad(y, ((0, 0), (pad, pad)))
    conv = jnp.zeros_like(y)
    for j in range(k):
        conv = conv + wf[0, 0, j] * yp[:, j:j + C]
    s = jax.nn.sigmoid(conv)
    return xf * s[:, :, None, None]


if __name__ == "__main__":
    def kernel_size_for(channels, gamma=2, b=1):
        ks = int(abs(np.log2(channels) / gamma + b))
        return ks if ks % 2 == 1 else ks + 1

    key = jax.random.PRNGKey(0)

    # 1) small f32 shape, fused path
    B, C, H, W = 2, 4, 16, 16
    ks = kernel_size_for(C)                               # -> 3
    kx, kw, key = jax.random.split(key, 3)
    x = jax.random.normal(kx, (B, C, H, W), dtype=jnp.float32)
    conv_w = jax.random.normal(kw, (1, 1, ks), dtype=jnp.float32) * 0.5
    out = jax.block_until_ready(eca_block(x, conv_w))
    np.testing.assert_allclose(np.asarray(out), np.asarray(eca_reference(x, conv_w)),
                               rtol=1e-5, atol=1e-5)

    # 2) non-128-multiple spatial size (H*W = 100), fused path
    k1, k2, key = jax.random.split(key, 3)
    xb = jax.random.normal(k1, (2, 8, 10, 10), dtype=jnp.float32)
    wb = jax.random.normal(k2, (1, 1, kernel_size_for(8)), dtype=jnp.float32) * 0.5
    outb = jax.block_until_ready(eca_block(xb, wb))
    np.testing.assert_allclose(np.asarray(outb), np.asarray(eca_reference(xb, wb)),
                               rtol=1e-5, atol=1e-5)

    # 3) bf16 I/O with f32 accumulation; exercises the chunked pooled reduction
    k3, k4, key = jax.random.split(key, 3)
    xc = jax.random.normal(k3, (2, 8, 64, 64), dtype=jnp.float32).astype(jnp.bfloat16)
    wc = jax.random.normal(k4, (1, 1, kernel_size_for(8)), dtype=jnp.float32) * 0.5
    outc = jax.block_until_ready(eca_block(xc, wc))
    refc = eca_reference(xc, wc)
    np.testing.assert_allclose(np.asarray(outc).astype(np.float32),
                               np.asarray(refc), rtol=2e-2, atol=2e-2)

    # 4) channel-tiled two-pass path (forced, small tiles to exercise the
    #    channel split + HW accumulation machinery)
    k5, k6 = jax.random.split(key)
    xd = jax.random.normal(k5, (2, 16, 32, 32), dtype=jnp.float32)
    wd = jax.random.normal(k6, (1, 1, kernel_size_for(16)), dtype=jnp.float32) * 0.5
    outd = jax.block_until_ready(
        eca_block(xd, wd, force_two_pass=True, c_tile=8, hw_tile=256))
    np.testing.assert_allclose(np.asarray(outd), np.asarray(eca_reference(xd, wd)),
                               rtol=1e-5, atol=1e-5)

    print("KERNEL_OK")
</pallas_src>

<mosaic_0001>
module attributes {stable_mosaic.version = 11 : i64} {
  func.func @kernel(%arg0: i32, %arg1: memref<1x4x256xf32, #tpu.memory_space<vmem>>, %arg2: memref<3xf32, #tpu.memory_space<smem>>, %arg3: memref<1x4x256xf32, #tpu.memory_space<vmem>>) attributes {dimension_semantics = [#tpu.dimension_semantics<parallel>], iteration_bounds = array<i64: 2>, scalar_prefetch = 0 : i64, scratch_operands = 0 : i64, tpu.core_type = #tpu.core_type<tc>, window_params = [{transform_indices = @transform_0, window_bounds = array<i64: 1, 4, 256>}, {transform_indices = @transform_1, window_bounds = array<i64: 3>}, {transform_indices = @transform_2, window_bounds = array<i64: 1, 4, 256>}]} {
    %c0 = arith.constant 0 : index
    %c0_0 = arith.constant 0 : index
    %c0_1 = arith.constant 0 : index
    %0 = vector.load %arg1[%c0, %c0_0, %c0_1] : memref<1x4x256xf32, #tpu.memory_space<vmem>>, vector<1x4x256xf32>
    %cst = arith.constant dense<0.000000e+00> : vector<1x4xf32>
    %1 = vector.multi_reduction <add>, %0, %cst [2] : vector<1x4x256xf32> to vector<1x4xf32>
    %cst_2 = arith.constant 3.906250e-03 : f32
    %2 = vector.broadcast %cst_2 : f32 to vector<1x4xf32>
    %3 = arith.mulf %1, %2 : vector<1x4xf32>
    %cst_3 = arith.constant 0.000000e+00 : f32
    %4 = vector.broadcast %cst_3 : f32 to vector<1x1xf32>
    %5 = tpu.concatenate %4, %3, %4 in 1 : vector<1x1xf32>, vector<1x4xf32>, vector<1x1xf32> -> vector<1x6xf32>
    %cst_4 = arith.constant 0.000000e+00 : f32
    %6 = vector.broadcast %cst_4 : f32 to vector<1x4xf32>
    %c0_5 = arith.constant 0 : index
    %7 = memref.load %arg2[%c0_5] : memref<3xf32, #tpu.memory_space<smem>>
    %8 = vector.extract_strided_slice %5 {offsets = [0, 0], sizes = [1, 4], strides = [1, 1]} : vector<1x6xf32> to vector<1x4xf32>
    %9 = vector.broadcast %7 : f32 to vector<1x4xf32>
    %10 = arith.mulf %9, %8 : vector<1x4xf32>
    %11 = arith.addf %6, %10 : vector<1x4xf32>
    %c1 = arith.constant 1 : index
    %12 = memref.load %arg2[%c1] : memref<3xf32, #tpu.memory_space<smem>>
    %13 = vector.extract_strided_slice %5 {offsets = [0, 1], sizes = [1, 4], strides = [1, 1]} : vector<1x6xf32> to vector<1x4xf32>
    %14 = vector.broadcast %12 : f32 to vector<1x4xf32>
    %15 = arith.mulf %14, %13 : vector<1x4xf32>
    %16 = arith.addf %11, %15 : vector<1x4xf32>
    %c2 = arith.constant 2 : index
    %17 = memref.load %arg2[%c2] : memref<3xf32, #tpu.memory_space<smem>>
    %18 = vector.extract_strided_slice %5 {offsets = [0, 2], sizes = [1, 4], strides = [1, 1]} : vector<1x6xf32> to vector<1x4xf32>
    %19 = vector.broadcast %17 : f32 to vector<1x4xf32>
    %20 = arith.mulf %19, %18 : vector<1x4xf32>
    %21 = arith.addf %16, %20 : vector<1x4xf32>
    %22 = arith.negf %21 : vector<1x4xf32>
    %23 = math.exp %22 : vector<1x4xf32>
    %cst_6 = arith.constant 1.000000e+00 : f32
    %24 = vector.broadcast %cst_6 : f32 to vector<1x4xf32>
    %25 = arith.addf %24, %23 : vector<1x4xf32>
    %26 = arith.divf %24, %25 : vector<1x4xf32>
    %27 = vector.shape_cast %26 : vector<1x4xf32> to vector<1x4x1xf32>
    %c0_7 = arith.constant 0 : index
    %c0_8 = arith.constant 0 : index
    %c0_9 = arith.constant 0 : index
    %28 = vector.load %arg1[%c0_7, %c0_8, %c0_9] : memref<1x4x256xf32, #tpu.memory_space<vmem>>, vector<1x4x256xf32>
    %29 = vector.broadcast %27 : vector<1x4x1xf32> to vector<1x4x256xf32>
    %30 = arith.mulf %28, %29 : vector<1x4x256xf32>
    %c0_10 = arith.constant 0 : index
    %c0_11 = arith.constant 0 : index
    %c0_12 = arith.constant 0 : index
    %31 = vector.load %arg3[%c0_10, %c0_11, %c0_12] : memref<1x4x256xf32, #tpu.memory_space<vmem>>, vector<1x4x256xf32>
    tpu.vector_store %arg3[%c0_10, %c0_11, %c0_12], %30 {strides = array<i32>} : memref<1x4x256xf32, #tpu.memory_space<vmem>>, vector<1x4x256xf32>,
    return
  }
  func.func @transform_0(%arg0: i32) -> (i32, i32, i32) {
    %c0_i32 = arith.constant 0 : i32
    %c0_i32_0 = arith.constant 0 : i32
    %c0_i32_1 = arith.constant 0 : i32
    return %arg0, %c0_i32, %c0_i32_0 : i32, i32, i32
  }
  func.func @transform_1(%arg0: i32) -> i32 {
    %c0_i32 = arith.constant 0 : i32
    %c0_i32_0 = arith.constant 0 : i32
    return %c0_i32 : i32
  }
  func.func @transform_2(%arg0: i32) -> (i32, i32, i32) {
    %c0_i32 = arith.constant 0 : i32
    %c0_i32_0 = arith.constant 0 : i32
    %c0_i32_1 = arith.constant 0 : i32
    return %arg0, %c0_i32, %c0_i32_0 : i32, i32, i32
  }
}

</mosaic_0001>

<llo_original>
// kernel: tpu_custom_call.1
$region0: #{tpu_custom_call.1}
  #allocation0 [shape = 'u32[]', space=smem, size = 0x4, offset = 0x4, fixed_abs, tag = 'smem constant byte address 0x4 - core index']
  #allocation1 [shape = 'u32[144,128]{1,0:T(1,128)}', space=vmem, size = 0x12000, scoped, tag = 'internal scratch']
  %s0 = inlined_call_operand.hbm [shape: f32[2,4,256], index: 0, kind: input, shape index: {}]
  %s1 = inlined_call_operand.vmem [shape: f32[3], index: 1, kind: input, shape index: {}]
  %s2 = inlined_call_operand.hbm [shape: f32[2,4,256], index: 2, kind: output, shape index: {}]
  %s3 = sld [smem:[#allocation0]]
  $region49: #{tpu_custom_call.1} parent=0
    _
  %s5 = ssub.s32 1, %s3
  %s6 = scalar_select 0, %s5, %s3
  $region1: #{tpu_custom_call.1} parent=0
    #allocation2 [shape = 'u8[8192]{0}', space=vmem, size = 0x2000, scoped, tag = 'input window, operand 0']
    #allocation3 [shape = 's32[2]{0}', space=sflag, size = 0x8, scoped, tag = 'scoped memory for tpu_custom_call.1']
    #allocation4 [shape = 's32[2]{0}', space=sflag, size = 0x8, scoped, tag = 'scoped memory for tpu_custom_call.1']
    #allocation5 [shape = 's32[2]{0}', space=sflag, size = 0x8, scoped, tag = 'scoped memory for tpu_custom_call.1']
    #allocation6 [shape = 'u8[512]{0}', space=smem, size = 0x200, scoped, tag = 'input window, operand 1, single buffered']
    #allocation7 [shape = 'u8[8192]{0}', space=vmem, size = 0x2000, scoped, tag = 'output window, operand 0']
    %7 = vsyncpa [#allocation3], 0
    %s8 = scalar_lea.sflag [#allocation3], 1
    %9 = vsyncpa %s8, 0
    %10 = vsyncpa [#allocation5], 0
    %11 = vsyncpa [#allocation4], 0
    %s12 = scalar_lea.sflag [#allocation4], 1
    %13 = vsyncpa %s12, 0
    loop: start=0, step=1, limit=4
    $region2: #{tpu_custom_call.1} parent=1 // loop_pre_header
      _
    $region3: #{tpu_custom_call.1} parent=1 // loop_header
      %s15 = sphi 0, %s19
      %p16 = scmp.ge.s32.totalorder %s15, 4
      %s25 = sphi 0, %s27
      %s28 = sphi 0, %s25
      %s29 = sphi 0, %s28
      %s45 = sphi 0, %s29
      %s49 = sphi 0, %s49
      %s51 = sphi 0, %s49
      %s52 = sphi 0, %s51
      %s66 = sphi 0, %s52
      %s72 = sphi 0, %s74
      %s75 = sphi 0, %s72
      %s76 = sphi 0, %s75
      %s92 = sphi 0, %s76
    $region4: #{tpu_custom_call.1} parent=1 // loop_header_branch
      %18 = sbr.rel (%p16) target = $region8
    $region5: #{tpu_custom_call.1} parent=1 // loop_body
      %s20 = ssub.s32 %s15, 1
      %s21 = ssub.s32 %s15, 2
      %s22 = sadd.s32 %s15, 1
      %s23 = ssub.s32 %s15, %s22
      %p24 = scmp.eq.s32.totalorder %s23, 0
      %s26 = sadd.s32 %s25, 1
      %s27 = scalar_select %p24, %s25, %s26
      %p30 = pneg %p24
      %p31 = scmp.eq.s32.totalorder %s15, 1
      %p32 = por %p30, %p31
      %p33 = scmp.ne.s32.totalorder %s25, %s28
      %p34 = scmp.eq.s32.totalorder %s15, 0
      %p35 = por %p33, %p34
      %p36 = scmp.ne.s32.totalorder %s25, %s28
      %p37 = scmp.eq.s32.totalorder %s20, 1
      %p38 = por %p36, %p37
      %p39 = scmp.ne.s32.totalorder %s28, %s29
      %p40 = scmp.eq.s32.totalorder %s20, 0
      %p41 = por %p39, %p40
      %p42 = scmp.ne.s32.totalorder %s28, %s29
      %p43 = scmp.eq.s32.totalorder %s21, 1
      %p44 = por %p42, %p43
      %p46 = scmp.ne.s32.totalorder %s29, %s45
      %p47 = scmp.eq.s32.totalorder %s21, 0
      %p48 = por %p46, %p47
      %s50 = sadd.s32 %s49, 1
      %p53 = scmp.eq.s32.totalorder %s15, 1
      %p54 = scmp.ne.s32.totalorder %s49, %s51
      %p55 = scmp.eq.s32.totalorder %s15, 0
      %p56 = por %p54, %p55
      %p57 = scmp.ne.s32.totalorder %s49, %s51
      %p58 = scmp.eq.s32.totalorder %s20, 1
      %p59 = por %p57, %p58
      %p60 = scmp.ne.s32.totalorder %s51, %s52
      %p61 = scmp.eq.s32.totalorder %s20, 0
      %p62 = por %p60, %p61
      %p63 = scmp.ne.s32.totalorder %s51, %s52
      %p64 = scmp.eq.s32.totalorder %s21, 1
      %p65 = por %p63, %p64
      %p67 = scmp.ne.s32.totalorder %s52, %s66
      %p68 = scmp.eq.s32.totalorder %s21, 0
      %p69 = por %p67, %p68
      %s70 = ssub.s32 %s15, %s22
      %p71 = scmp.eq.s32.totalorder %s70, 0
      %s73 = sadd.s32 %s72, 1
      %s74 = scalar_select %p71, %s72, %s73
      %p77 = pneg %p71
      %p78 = scmp.eq.s32.totalorder %s15, 1
      %p79 = por %p77, %p78
      %p80 = scmp.ne.s32.totalorder %s72, %s75
      %p81 = scmp.eq.s32.totalorder %s15, 0
      %p82 = por %p80, %p81
      %p83 = scmp.ne.s32.totalorder %s72, %s75
      %p84 = scmp.eq.s32.totalorder %s20, 1
      %p85 = por %p83, %p84
      %p86 = scmp.ne.s32.totalorder %s75, %s76
      %p87 = scmp.eq.s32.totalorder %s20, 0
      %p88 = por %p86, %p87
      %p89 = scmp.ne.s32.totalorder %s75, %s76
      %p90 = scmp.eq.s32.totalorder %s21, 1
      %p91 = por %p89, %p90
      %p93 = scmp.ne.s32.totalorder %s76, %s92
      %p94 = scmp.eq.s32.totalorder %s21, 0
      %p95 = por %p93, %p94
      %p96 = scmp.le.s32.totalorder 1, %s15
      %p97 = scmp.lt.s32.totalorder %s15, 3
      %p98 = pnand %p96, %p97
      %p99 = pneg %p98
      // Predicated region
      $region9: #{tpu_custom_call.1} parent=5 // pred_check
        _
      $region10: #{tpu_custom_call.1} parent=5 // pred_check_branch
        %101 = sbr.rel (%p98) target = $region12
      $region11: #{tpu_custom_call.1} parent=5 // pred_region
        %s102 = ssub.s32 %s15, 1
        // Predicated region
        $region13: #{tpu_custom_call.1} parent=11 // pred_check
          %p103 = pneg %p62
        $region14: #{tpu_custom_call.1} parent=11 // pred_check_branch
          %105 = sbr.rel (%p103) target = $region16
        $region15: #{tpu_custom_call.1} parent=11 // pred_region
          %s107 = ssub.s32 16, 16
          %108 = vsyncadd [#allocation5], %s107
          %s110 = sshll.u32 %s1, 4
          %s111 = int_to_ptr.vmem [resolvable:$true] %s110
          %113 = dma.vmem_to_smem %s111, 16, [#allocation6], [#allocation5]
        $region16: #{tpu_custom_call.1} parent=11 // pred_fallthru
          _
      $region12: #{tpu_custom_call.1} parent=5 // pred_fallthru
        _
      %p114 = scmp.lt.s32.totalorder %s15, 2
      // Predicated region
      $region17: #{tpu_custom_call.1} parent=5 // pred_check
        %p115 = pneg %p114
      $region18: #{tpu_custom_call.1} parent=5 // pred_check_branch
        %117 = sbr.rel (%p115) target = $region20
      $region19: #{tpu_custom_call.1} parent=5 // pred_region
        // Predicated region
        $region21: #{tpu_custom_call.1} parent=19 // pred_check
          %p118 = pneg %p35
        $region22: #{tpu_custom_call.1} parent=19 // pred_check_branch
          %120 = sbr.rel (%p118) target = $region24
        $region23: #{tpu_custom_call.1} parent=19 // pred_region
          %s121 = sand.u32 %s25, 1
          %s122 = scalar_lea.sflag [#allocation3], %s121
          %s123 = sand.u32 %s25, 1
          %s124 = smul.addr %s123, 8
          %s125 = scalar_lea.vmem [#allocation2], %s124
          %s127 = ssub.s32 128, 128
          %128 = vsyncadd %s122, %s127
          %s129 = smul.addr %s15, 2
          %s130 = smul.addr %s129, 64
          %s131 = scalar_lea.hbm %s0, %s130
          %s133 = sshll.u32 %s125, 4
          %s134 = int_to_ptr.vmem [resolvable:$true] %s133
          %136 = dma.hbm_to_vmem [thread:$0]  %s131, 128, %s134, %s122
        $region24: #{tpu_custom_call.1} parent=19 // pred_fallthru
          _
      $region20: #{tpu_custom_call.1} parent=5 // pred_fallthru
        _
      %p137 = scmp.le.s32.totalorder 1, %s15
      %p138 = scmp.lt.s32.totalorder %s15, 3
      %p139 = pnand %p137, %p138
      %p140 = pneg %p139
      // Predicated region
      $region25: #{tpu_custom_call.1} parent=5 // pred_check
        _
      $region26: #{tpu_custom_call.1} parent=5 // pred_check_branch
        %142 = sbr.rel (%p139) target = $region28
      $region27: #{tpu_custom_call.1} parent=5 // pred_region
        %s143 = ssub.s32 %s15, 1
        %s144 = sand.u32 %s28, 1
        %s145 = scalar_lea.sflag [#allocation3], %s144
        %s146 = sand.u32 %s28, 1
        %s147 = smul.addr %s146, 8
        %s148 = scalar_lea.vmem [#allocation2], %s147
        // Predicated region
        $region29: #{tpu_custom_call.1} parent=27 // pred_check
          %p149 = pneg %p41
        $region30: #{tpu_custom_call.1} parent=27 // pred_check_branch
          %151 = sbr.rel (%p149) target = $region32
        $region31: #{tpu_custom_call.1} parent=27 // pred_region
          %152 = dma.done %s145, 128
        $region32: #{tpu_custom_call.1} parent=27 // pred_fallthru
          _
        // Predicated region
        $region33: #{tpu_custom_call.1} parent=27 // pred_check
          %p153 = pneg %p62
        $region34: #{tpu_custom_call.1} parent=27 // pred_check_branch
          %155 = sbr.rel (%p153) target = $region36
        $region35: #{tpu_custom_call.1} parent=27 // pred_region
          %156 = dma.done [#allocation5], 16
        $region36: #{tpu_custom_call.1} parent=27 // pred_fallthru
          _
        %157 = sfence
        %s158 = sand.u32 %s28, 1
        %s159 = scalar_lea.sflag [#allocation3], %s158
        %s160 = sand.u32 %s28, 1
        %s161 = smul.addr %s160, 8
        %s162 = scalar_lea.vmem [#allocation2], %s161
        %p163 = pneg %p41
        %p164 = pneg %p38
        %p165 = pneg %p62
        %p166 = pneg %p59
        %p167 = pneg %p88
        %p168 = pneg %p85
        %s169 = sand.u32 %s75, 1
        %s170 = scalar_lea.sflag [#allocation4], %s169
        %s171 = sand.u32 %s75, 1
        %s172 = smul.addr %s171, 8
        %s173 = scalar_lea.vmem [#allocation7], %s172
        %v174 = vld [vmem:[%s148] sm:$0xff]
        %v176 = vcombine.high %v174, %v174
        %vm178 = vcmask 1043456
        %v179 = vsel %vm178, %v174, 0.0
        %v180 = vsel %vm178, %v176, 0.0
        %v181 = vadd.f32 %v179, %v180
        %182 = vadd.xlane.f32.xlu0 %v181
        %v183 = vpop.xlane.xlu0 %182
        %v184 = vmul.f32 %v183, 0.00390625
        %v186 = vlaneseq
        %v187 = vand.u32 %v186, 127
        %v188 = vadd.s32 %v187, 4294967295
        %v189 = vlaneseq
        %v190 = vshrl.u32 %v189, 7
        %v191 = vsub.s32 %v188, %v190
        %v192 = vrot.slane %v184, %v191
        %vm194 = vcmask 7168
        %v195 = vsel %vm194, 0.0, %v192
        %vm196 = vcmask 39936
        %v197 = vsel %vm196, %v195, 0.0
        %s198 = sld [smem:[#allocation6]]
        %v199 = vstv %s198
        %v200 = vmul.f32 %v199, %v197
        %v201 = vadd.f32 %v200, 0.0
        %s202 = sld [smem:[#allocation6 + $0x1]]
        %v203 = vstv %s202
        %v204 = vmul.f32 %v203, %v197
        %206 = vrot.lane.b32.xlu0 %v204, 127
        %v207 = vpop.permute.xlu0 %206
        %v209 = vadd.f32 %v201, %v207
        %s210 = sld [smem:[#allocation6 + $0x2]]
        %v211 = vstv %s210
        %v212 = vmul.f32 %v211, %v197
        %214 = vrot.lane.b32.xlu0 %v212, 126
        %v215 = vpop.permute.xlu0 %214
        %v217 = vadd.f32 %v209, %v215
        %v218 = vxor.u32 %v217, 2147483648
        %v219 = vmul.f32 %v218, 1.442695
        %v220 = vpow.pop %v219
        %v221 = vadd.f32 %v220, 1.0
        %v222 = vrcp.pop %v221
        %v223 = vmul.f32 1.0, %v222
        %v224 = vlaneseq
        %v225 = vshrl.u32 %v224, 7
        %v226 = vsub.s32 0, %v225
        %v227 = vrot.slane %v223, %v226
        %229 = vbcast.lane.b32.xlu0 %v227, 256
        %v230 = vpop.permute.xlu0 %229
        %v233 = vunpack.c.l.s4 839922192
        %v234 = vunpack.c.0.s8 %v233
        %v235 = vlaneseq
        %v236 = vshrl.u32 %v235, 7
        %v237 = vsub.s32 %v234, %v236
        %v238 = vrot.slane %v230, %v237
        %v240 = vmul.f32 %v174, %v238
        %241 = vst [vmem:[%s173] sm:$0xff] %v240
        %s242 = sand.u32 %s75, 1
        %s243 = scalar_lea.sflag [#allocation4], %s242
        %s244 = sand.u32 %s75, 1
        %s245 = smul.addr %s244, 8
        %s246 = scalar_lea.vmem [#allocation7], %s245
        // Predicated region
        $region37: #{tpu_custom_call.1} parent=27 // pred_check
          %p247 = pneg %p85
        $region38: #{tpu_custom_call.1} parent=27 // pred_check_branch
          %249 = sbr.rel (%p247) target = $region40
        $region39: #{tpu_custom_call.1} parent=27 // pred_region
          %s251 = ssub.s32 128, 128
          %252 = vsyncadd %s243, %s251
          %s253 = smul.addr %s20, 2
          %s254 = smul.addr %s253, 64
          %s255 = scalar_lea.hbm %s2, %s254
          %s257 = sshll.u32 %s246, 4
          %s258 = int_to_ptr.vmem [resolvable:$true] %s257
          %260 = dma.vmem_to_hbm [thread:$0]  %s258, 128, %s255, %s243
        $region40: #{tpu_custom_call.1} parent=27 // pred_fallthru
          _
      $region28: #{tpu_custom_call.1} parent=5 // pred_fallthru
        _
      %p261 = scmp.le.s32.totalorder 2, %s15
      // Predicated region
      $region41: #{tpu_custom_call.1} parent=5 // pred_check
        %p262 = pneg %p261
      $region42: #{tpu_custom_call.1} parent=5 // pred_check_branch
        %264 = sbr.rel (%p262) target = $region44
      $region43: #{tpu_custom_call.1} parent=5 // pred_region
        %s265 = ssub.s32 %s15, 2
        // Predicated region
        $region45: #{tpu_custom_call.1} parent=43 // pred_check
          %p266 = pneg %p91
        $region46: #{tpu_custom_call.1} parent=43 // pred_check_branch
          %268 = sbr.rel (%p266) target = $region48
        $region47: #{tpu_custom_call.1} parent=43 // pred_region
          %s269 = sand.u32 %s76, 1
          %s270 = scalar_lea.sflag [#allocation4], %s269
          %s271 = sand.u32 %s76, 1
          %s272 = smul.addr %s271, 8
          %s273 = scalar_lea.vmem [#allocation7], %s272
          %274 = dma.done %s270, 128
        $region48: #{tpu_custom_call.1} parent=43 // pred_fallthru
          _
      $region44: #{tpu_custom_call.1} parent=5 // pred_fallthru
        _
    $region6: #{tpu_custom_call.1} parent=1 // loop_footer
      %s19 = sadd.s32 1, %s15
    $region7: #{tpu_custom_call.1} parent=1 // loop_footer_branch
      %14 = sbr.rel target = $region3
    $region8: #{tpu_custom_call.1} parent=1 // loop_exit
      _
    %275 = vsyncpa [#allocation3], 1
    %s276 = scalar_lea.sflag [#allocation3], 1
    %277 = vsyncpa %s276, 1
    %278 = vsyncpa [#allocation4], 1
    %s279 = scalar_lea.sflag [#allocation4], 1
    %280 = vsyncpa %s279, 1
    %281 = vsyncpa [#allocation5], 1
    %s282 = scalar_lea.sflag [#allocation5], 1
    %283 = vsyncpa %s282, 1

</llo_original>
